<compile_context>
chip_gen: v7x
topology: tpu7x:2x2x1
jax: 0.10.0
libtpu: 0.0.40
codegen_flags: <defaults>
</compile_context>

<pallas_src>
import functools

import jax
import jax.numpy as jnp
from jax.experimental import pallas as pl
from jax.experimental.pallas import tpu as pltpu


def _sortnet_kernel(q_ref, k_ref, w_ref, *rest, dh, bucket_size,
                    non_permutative, sinkhorn_iter, temperature):
    """One (head, batch-tile) grid step.

    q_ref/k_ref: (bt, 1, buckets, bucket_size*dh)  lane-dense input blocks
    w_ref:       (1, 2*dh, buckets)                per-head weight
    g_ref:       (bt, 1, buckets, buckets)         [sinkhorn path only]
    o_ref:       (bt, 1, buckets, buckets)
    """
    if non_permutative:
        (o_ref,) = rest
    else:
        g_ref, o_ref = rest

    bt = q_ref.shape[0]
    buckets = q_ref.shape[2]

    def bucket_sum(ref):
        # In-bucket sum as a static strided lane-slice accumulation in f32
        # (no lane-splitting reshape of the minor dim; bf16-safe accumulate).
        x = ref[...].reshape(bt, buckets, bucket_size * dh)
        acc = x[..., 0:dh].astype(jnp.float32)
        for j in range(1, bucket_size):
            acc = acc + x[..., j * dh:(j + 1) * dh].astype(jnp.float32)
        return acc.reshape(bt * buckets, dh)

    qs = bucket_sum(q_ref)                                   # (bt*buckets, dh)
    ks = bucket_sum(k_ref)

    w = w_ref[...].reshape(2 * dh, buckets).astype(jnp.float32)
    # x = cat([b_q, b_k], -1);  x @ W  ==  b_q @ W[:dh] + b_k @ W[dh:]
    r = (jnp.dot(qs, w[:dh, :], preferred_element_type=jnp.float32)
         + jnp.dot(ks, w[dh:, :], preferred_element_type=jnp.float32))
    r = jnp.maximum(r, 0.0)                                  # nn.ReLU
    r = r.reshape(bt, buckets, buckets)

    if non_permutative:
        # exact softmax over the last dim (no approx reciprocal)
        m = jnp.max(r, axis=-1, keepdims=True)
        e = jnp.exp(r - m)
        p = e / jnp.sum(e, axis=-1, keepdims=True)
        o_ref[...] = p.reshape(o_ref.shape).astype(o_ref.dtype)
    else:
        # gumbel_sinkhorn: r = (log(R + eps) + gumbel) / temperature, then
        # `sinkhorn_iter` rounds of log-space row/column normalization.
        eps = 1e-6
        g = g_ref[...].reshape(bt, buckets, buckets).astype(jnp.float32)
        lg = (jnp.log(r + eps) + g) * (1.0 / temperature)

        def _lse(x, axis):
            m = jnp.max(x, axis=axis, keepdims=True)
            return m + jnp.log(jnp.sum(jnp.exp(x - m), axis=axis, keepdims=True))

        for _ in range(sinkhorn_iter):                       # static, small
            lg = lg - _lse(lg, 2)
            lg = lg - _lse(lg, 1)
        o_ref[...] = jnp.exp(lg).reshape(o_ref.shape).astype(o_ref.dtype)


def simple_sort_net(q, k, linear, *, heads, buckets, non_permutative=True,
                    temperature=0.7, sinkhorn_iter=8, gumbel_noise=None):
    """Pallas implementation of SimpleSortNet.forward."""
    bh, n, dh = q.shape
    assert bh % heads == 0, "bh must be batch * heads"
    b = bh // heads
    dim = linear.shape[2]
    assert dim == 2 * dh, "module's `dim` must equal 2 * head dim"
    assert n % buckets == 0, "sequence length must be divisible by buckets"
    bucket_size = n // buckets
    lane = bucket_size * dh                     # lane-dense last dim for q/k

    # Free metadata reshapes (no data movement): batch / head / bucket axes,
    # with the in-bucket*feature axis folded into a lane-dense last dim.
    q4 = q.reshape(b, heads, buckets, lane)
    k4 = k.reshape(b, heads, buckets, lane)
    w = linear.reshape(heads, dim, buckets)

    # ---- padding-aware, generation-aware VMEM budgeting -------------------
    def _pad(x, m):
        return ((x + m - 1) // m) * m

    itemsize = jnp.dtype(q.dtype).itemsize
    sub = max(8, 32 // itemsize)                # sublane tile (8 f32, 16 bf16)
    qk_block = _pad(buckets, sub) * _pad(lane, 128) * itemsize      # per batch row
    o_block = _pad(buckets, 8) * _pad(buckets, 128) * 4
    g_block = 0 if non_permutative else o_block
    per_row = 2 * qk_block + o_block + g_block                      # per buffer set
    w_bytes = _pad(dim, 8) * _pad(buckets, 128) * 4

    try:
        phys_vmem = int(pltpu.get_tpu_info().vmem_capacity_bytes)
    except Exception:
        phys_vmem = 64 << 20                    # v7x per-TC VMEM (smallest gen)
    # ~1/6 of physical VMEM of padded block bytes per buffer set; with
    # double-buffering that is ~1/3 of VMEM, leaving ample headroom.
    budget = max(4 << 20, min(16 << 20, phys_vmem // 6))

    cap_m = max(1, 512 // buckets)              # ~512 matmul rows is plenty
    cap_vmem = max(1, budget // max(1, per_row))
    cap = max(1, min(b, cap_m, cap_vmem))
    bt = next(c for c in range(cap, 0, -1) if b % c == 0)

    vmem_limit = 2 * bt * per_row + 2 * w_bytes + (4 << 20)
    vmem_limit = min(max(vmem_limit, 16 << 20), phys_vmem * 3 // 4)

    # Grid: heads on the major axis, batch tiles on the MINOR axis so that
    # w_spec's index_map (which ignores the batch-tile index) keeps the weight
    # resident across consecutive steps.  Do not swap these axes.
    grid = (heads, b // bt)

    qk_spec = pl.BlockSpec((bt, 1, buckets, lane), lambda h, i: (i, h, 0, 0))
    w_spec = pl.BlockSpec((1, dim, buckets), lambda h, i: (h, 0, 0))
    o_spec = pl.BlockSpec((bt, 1, buckets, buckets), lambda h, i: (i, h, 0, 0))

    in_specs = [qk_spec, qk_spec, w_spec]
    args = [q4, k4, w]
    if not non_permutative:
        # TODO(synk): torch samples gumbel noise with its own RNG inside
        # forward; here the noise is sampled with jax.random in the wrapper
        # and passed in (deterministic, verifiable against the JAX reference).
        assert gumbel_noise is not None, "gumbel_noise required when permutative"
        g4 = gumbel_noise.reshape(b, heads, buckets, buckets)
        in_specs.append(pl.BlockSpec((bt, 1, buckets, buckets),
                                     lambda h, i: (i, h, 0, 0)))
        args.append(g4)

    kernel = functools.partial(
        _sortnet_kernel, dh=dh, bucket_size=bucket_size,
        non_permutative=non_permutative, sinkhorn_iter=sinkhorn_iter,
        temperature=temperature)

    out = pl.pallas_call(
        kernel,
        out_shape=jax.ShapeDtypeStruct((b, heads, buckets, buckets), jnp.float32),
        grid=grid,
        in_specs=in_specs,
        out_specs=o_spec,
        compiler_params=pltpu.CompilerParams(
            dimension_semantics=("parallel", "parallel"),
            vmem_limit_bytes=int(vmem_limit)),
    )(*args)

    return out.reshape(bh, buckets, buckets)


def _reference(q, k, linear, *, heads, buckets, non_permutative=True,
               temperature=0.7, sinkhorn_iter=8, gumbel_noise=None):
    """Pure-JAX port of the PyTorch forward, for correctness checking."""
    bh, n, dh = q.shape
    b = bh // heads
    dim = linear.shape[2]
    bq = q.reshape(bh, buckets, n // buckets, dh).sum(axis=2)
    bk = k.reshape(bh, buckets, n // buckets, dh).sum(axis=2)
    x = jnp.concatenate([bq, bk], axis=-1)                       # (bh, buckets, 2d)
    W = jnp.broadcast_to(linear, (b, heads, dim, buckets)).reshape(bh, dim, buckets)
    R = jnp.einsum('bud,bdc->buc', x, W)
    R = jnp.maximum(R, 0.0)                                      # ReLU
    if non_permutative:
        return jax.nn.softmax(R, axis=-1)

    def _lse(x, axis):
        m = jnp.max(x, axis=axis, keepdims=True)
        return m + jnp.log(jnp.sum(jnp.exp(x - m), axis=axis, keepdims=True))

    r = jnp.log(R + 1e-6)
    r = (r + gumbel_noise) / temperature
    for _ in range(sinkhorn_iter):
        r = r - _lse(r, 2)
        r = r - _lse(r, 1)
    return jnp.exp(r)


if __name__ == "__main__":
    heads = 4
    batch = 2
    buckets = 8
    seq = 64
    d_head = 16
    dim = 2 * d_head            # SimpleSortNet is built with dim = 2 * head dim
    bh = batch * heads

    key = jax.random.PRNGKey(0)
    kq, kk, kw, kg = jax.random.split(key, 4)
    q = jax.random.normal(kq, (bh, seq, d_head), dtype=jnp.float32)
    k = jax.random.normal(kk, (bh, seq, d_head), dtype=jnp.float32)
    linear = jax.random.normal(kw, (1, heads, dim, buckets), dtype=jnp.float32)

    # --- non_permutative = True path (ReLU -> softmax) ---
    out = simple_sort_net(q, k, linear, heads=heads, buckets=buckets,
                          non_permutative=True)
    out = jax.block_until_ready(out)
    ref = _reference(q, k, linear, heads=heads, buckets=buckets,
                     non_permutative=True)
    assert out.shape == (bh, buckets, buckets)
    err = float(jnp.max(jnp.abs(out - ref)))
    assert err < 1e-3, f"softmax path mismatch (max abs err {err})"

    # --- non_permutative = False path (gumbel-sinkhorn, noise from wrapper) ---
    u = jax.random.uniform(kg, (bh, buckets, buckets), dtype=jnp.float32)
    gumbel = -jnp.log(-jnp.log(u + 1e-6) + 1e-6)
    out2 = simple_sort_net(q, k, linear, heads=heads, buckets=buckets,
                           non_permutative=False, temperature=0.7,
                           sinkhorn_iter=8, gumbel_noise=gumbel)
    out2 = jax.block_until_ready(out2)
    ref2 = _reference(q, k, linear, heads=heads, buckets=buckets,
                      non_permutative=False, temperature=0.7,
                      sinkhorn_iter=8, gumbel_noise=gumbel)
    err2 = float(jnp.max(jnp.abs(out2 - ref2)))
    assert err2 < 1e-3, f"sinkhorn path mismatch (max abs err {err2})"

    print("KERNEL_OK")
</pallas_src>

<mosaic_0001>
module attributes {stable_mosaic.version = 11 : i64} {
  func.func @_sortnet_kernel(%arg0: i32, %arg1: i32, %arg2: memref<2x1x8x128xf32, #tpu.memory_space<vmem>>, %arg3: memref<2x1x8x128xf32, #tpu.memory_space<vmem>>, %arg4: memref<1x32x8xf32, #tpu.memory_space<vmem>>, %arg5: memref<2x1x8x8xf32, #tpu.memory_space<vmem>>) attributes {dimension_semantics = [#tpu.dimension_semantics<parallel>, #tpu.dimension_semantics<parallel>], iteration_bounds = array<i64: 4, 1>, scalar_prefetch = 0 : i64, scratch_operands = 0 : i64, tpu.core_type = #tpu.core_type<tc>, window_params = [{transform_indices = @transform_0, window_bounds = array<i64: 2, 1, 8, 128>}, {transform_indices = @transform_1, window_bounds = array<i64: 2, 1, 8, 128>}, {transform_indices = @transform_2, window_bounds = array<i64: 1, 32, 8>}, {transform_indices = @transform_3, window_bounds = array<i64: 2, 1, 8, 8>}]} {
    %c0 = arith.constant 0 : index
    %c0_0 = arith.constant 0 : index
    %c0_1 = arith.constant 0 : index
    %c0_2 = arith.constant 0 : index
    %0 = vector.load %arg2[%c0, %c0_0, %c0_1, %c0_2] : memref<2x1x8x128xf32, #tpu.memory_space<vmem>>, vector<2x1x8x128xf32>
    %1 = vector.shape_cast %0 : vector<2x1x8x128xf32> to vector<2x8x128xf32>
    %2 = vector.extract_strided_slice %1 {offsets = [0, 0, 0], sizes = [2, 8, 16], strides = [1, 1, 1]} : vector<2x8x128xf32> to vector<2x8x16xf32>
    %3 = vector.extract_strided_slice %1 {offsets = [0, 0, 16], sizes = [2, 8, 16], strides = [1, 1, 1]} : vector<2x8x128xf32> to vector<2x8x16xf32>
    %4 = arith.addf %2, %3 : vector<2x8x16xf32>
    %5 = vector.extract_strided_slice %1 {offsets = [0, 0, 32], sizes = [2, 8, 16], strides = [1, 1, 1]} : vector<2x8x128xf32> to vector<2x8x16xf32>
    %6 = arith.addf %4, %5 : vector<2x8x16xf32>
    %7 = vector.extract_strided_slice %1 {offsets = [0, 0, 48], sizes = [2, 8, 16], strides = [1, 1, 1]} : vector<2x8x128xf32> to vector<2x8x16xf32>
    %8 = arith.addf %6, %7 : vector<2x8x16xf32>
    %9 = vector.extract_strided_slice %1 {offsets = [0, 0, 64], sizes = [2, 8, 16], strides = [1, 1, 1]} : vector<2x8x128xf32> to vector<2x8x16xf32>
    %10 = arith.addf %8, %9 : vector<2x8x16xf32>
    %11 = vector.extract_strided_slice %1 {offsets = [0, 0, 80], sizes = [2, 8, 16], strides = [1, 1, 1]} : vector<2x8x128xf32> to vector<2x8x16xf32>
    %12 = arith.addf %10, %11 : vector<2x8x16xf32>
    %13 = vector.extract_strided_slice %1 {offsets = [0, 0, 96], sizes = [2, 8, 16], strides = [1, 1, 1]} : vector<2x8x128xf32> to vector<2x8x16xf32>
    %14 = arith.addf %12, %13 : vector<2x8x16xf32>
    %15 = vector.extract_strided_slice %1 {offsets = [0, 0, 112], sizes = [2, 8, 16], strides = [1, 1, 1]} : vector<2x8x128xf32> to vector<2x8x16xf32>
    %16 = arith.addf %14, %15 : vector<2x8x16xf32>
    %17 = vector.shape_cast %16 : vector<2x8x16xf32> to vector<16x16xf32>
    %c0_3 = arith.constant 0 : index
    %c0_4 = arith.constant 0 : index
    %c0_5 = arith.constant 0 : index
    %c0_6 = arith.constant 0 : index
    %18 = vector.load %arg3[%c0_3, %c0_4, %c0_5, %c0_6] : memref<2x1x8x128xf32, #tpu.memory_space<vmem>>, vector<2x1x8x128xf32>
    %19 = vector.shape_cast %18 : vector<2x1x8x128xf32> to vector<2x8x128xf32>
    %20 = vector.extract_strided_slice %19 {offsets = [0, 0, 0], sizes = [2, 8, 16], strides = [1, 1, 1]} : vector<2x8x128xf32> to vector<2x8x16xf32>
    %21 = vector.extract_strided_slice %19 {offsets = [0, 0, 16], sizes = [2, 8, 16], strides = [1, 1, 1]} : vector<2x8x128xf32> to vector<2x8x16xf32>
    %22 = arith.addf %20, %21 : vector<2x8x16xf32>
    %23 = vector.extract_strided_slice %19 {offsets = [0, 0, 32], sizes = [2, 8, 16], strides = [1, 1, 1]} : vector<2x8x128xf32> to vector<2x8x16xf32>
    %24 = arith.addf %22, %23 : vector<2x8x16xf32>
    %25 = vector.extract_strided_slice %19 {offsets = [0, 0, 48], sizes = [2, 8, 16], strides = [1, 1, 1]} : vector<2x8x128xf32> to vector<2x8x16xf32>
    %26 = arith.addf %24, %25 : vector<2x8x16xf32>
    %27 = vector.extract_strided_slice %19 {offsets = [0, 0, 64], sizes = [2, 8, 16], strides = [1, 1, 1]} : vector<2x8x128xf32> to vector<2x8x16xf32>
    %28 = arith.addf %26, %27 : vector<2x8x16xf32>
    %29 = vector.extract_strided_slice %19 {offsets = [0, 0, 80], sizes = [2, 8, 16], strides = [1, 1, 1]} : vector<2x8x128xf32> to vector<2x8x16xf32>
    %30 = arith.addf %28, %29 : vector<2x8x16xf32>
    %31 = vector.extract_strided_slice %19 {offsets = [0, 0, 96], sizes = [2, 8, 16], strides = [1, 1, 1]} : vector<2x8x128xf32> to vector<2x8x16xf32>
    %32 = arith.addf %30, %31 : vector<2x8x16xf32>
    %33 = vector.extract_strided_slice %19 {offsets = [0, 0, 112], sizes = [2, 8, 16], strides = [1, 1, 1]} : vector<2x8x128xf32> to vector<2x8x16xf32>
    %34 = arith.addf %32, %33 : vector<2x8x16xf32>
    %35 = vector.shape_cast %34 : vector<2x8x16xf32> to vector<16x16xf32>
    %c0_7 = arith.constant 0 : index
    %c0_8 = arith.constant 0 : index
    %c0_9 = arith.constant 0 : index
    %36 = vector.load %arg4[%c0_7, %c0_8, %c0_9] : memref<1x32x8xf32, #tpu.memory_space<vmem>>, vector<1x32x8xf32>
    %37 = vector.shape_cast %36 : vector<1x32x8xf32> to vector<32x8xf32>
    %38 = vector.extract_strided_slice %37 {offsets = [0, 0], sizes = [16, 8], strides = [1, 1]} : vector<32x8xf32> to vector<16x8xf32>
    %cst = arith.constant dense<0.000000e+00> : vector<16x8xf32>
    %39 = tpu.matmul %17, %38, %cst {dimension_numbers = #tpu.dot_dimension_numbers<[1], [0], [0], [1], [0, 0, 1, 1], [], []>} : vector<16x16xf32>, vector<16x8xf32>, vector<16x8xf32> -> vector<16x8xf32>
    %40 = vector.extract_strided_slice %37 {offsets = [16, 0], sizes = [16, 8], strides = [1, 1]} : vector<32x8xf32> to vector<16x8xf32>
    %cst_10 = arith.constant dense<0.000000e+00> : vector<16x8xf32>
    %41 = tpu.matmul %35, %40, %cst_10 {dimension_numbers = #tpu.dot_dimension_numbers<[1], [0], [0], [1], [0, 0, 1, 1], [], []>} : vector<16x16xf32>, vector<16x8xf32>, vector<16x8xf32> -> vector<16x8xf32>
    %42 = arith.addf %39, %41 : vector<16x8xf32>
    %cst_11 = arith.constant 0.000000e+00 : f32
    %43 = vector.broadcast %cst_11 : f32 to vector<16x8xf32>
    %44 = arith.maximumf %42, %43 : vector<16x8xf32>
    %45 = vector.shape_cast %44 : vector<16x8xf32> to vector<2x8x8xf32>
    %cst_12 = arith.constant dense<0xFF800000> : vector<2x8xf32>
    %46 = vector.multi_reduction <maximumf>, %45, %cst_12 [2] : vector<2x8x8xf32> to vector<2x8xf32>
    %47 = vector.shape_cast %46 : vector<2x8xf32> to vector<2x8x1xf32>
    %48 = vector.broadcast %47 : vector<2x8x1xf32> to vector<2x8x8xf32>
    %49 = arith.subf %45, %48 : vector<2x8x8xf32>
    %50 = math.exp %49 : vector<2x8x8xf32>
    %cst_13 = arith.constant dense<0.000000e+00> : vector<2x8xf32>
    %51 = vector.multi_reduction <add>, %50, %cst_13 [2] : vector<2x8x8xf32> to vector<2x8xf32>
    %52 = vector.shape_cast %51 : vector<2x8xf32> to vector<2x8x1xf32>
    %53 = vector.broadcast %52 : vector<2x8x1xf32> to vector<2x8x8xf32>
    %54 = arith.divf %50, %53 : vector<2x8x8xf32>
    %55 = vector.shape_cast %54 : vector<2x8x8xf32> to vector<2x1x8x8xf32>
    %c0_14 = arith.constant 0 : index
    %c0_15 = arith.constant 0 : index
    %c0_16 = arith.constant 0 : index
    %c0_17 = arith.constant 0 : index
    %56 = vector.load %arg5[%c0_14, %c0_15, %c0_16, %c0_17] : memref<2x1x8x8xf32, #tpu.memory_space<vmem>>, vector<2x1x8x8xf32>
    tpu.vector_store %arg5[%c0_14, %c0_15, %c0_16, %c0_17], %55 {strides = array<i32>} : memref<2x1x8x8xf32, #tpu.memory_space<vmem>>, vector<2x1x8x8xf32>,
    return
  }
  func.func @transform_0(%arg0: i32, %arg1: i32) -> (i32, i32, i32, i32) {
    %c0_i32 = arith.constant 0 : i32
    %c0_i32_0 = arith.constant 0 : i32
    %c0_i32_1 = arith.constant 0 : i32
    return %arg1, %arg0, %c0_i32, %c0_i32_0 : i32, i32, i32, i32
  }
  func.func @transform_1(%arg0: i32, %arg1: i32) -> (i32, i32, i32, i32) {
    %c0_i32 = arith.constant 0 : i32
    %c0_i32_0 = arith.constant 0 : i32
    %c0_i32_1 = arith.constant 0 : i32
    return %arg1, %arg0, %c0_i32, %c0_i32_0 : i32, i32, i32, i32
  }
  func.func @transform_2(%arg0: i32, %arg1: i32) -> (i32, i32, i32) {
    %c0_i32 = arith.constant 0 : i32
    %c0_i32_0 = arith.constant 0 : i32
    %c0_i32_1 = arith.constant 0 : i32
    return %arg0, %c0_i32, %c0_i32_0 : i32, i32, i32
  }
  func.func @transform_3(%arg0: i32, %arg1: i32) -> (i32, i32, i32, i32) {
    %c0_i32 = arith.constant 0 : i32
    %c0_i32_0 = arith.constant 0 : i32
    %c0_i32_1 = arith.constant 0 : i32
    return %arg1, %arg0, %c0_i32, %c0_i32_0 : i32, i32, i32, i32
  }
}

</mosaic_0001>

<llo_original>
// kernel: tpu_custom_call.1
$region0: #{tpu_custom_call.1}
  #allocation0 [shape = 'u32[]', space=smem, size = 0x4, offset = 0x4, fixed_abs, tag = 'smem constant byte address 0x4 - core index']
  #allocation1 [shape = 'u32[144,128]{1,0:T(1,128)}', space=vmem, size = 0x12000, scoped, tag = 'internal scratch']
  %s0 = inlined_call_operand.vmem [shape: f32[2,4,8,128], index: 0, kind: input, shape index: {}]
  %s1 = inlined_call_operand.vmem [shape: f32[2,4,8,128], index: 1, kind: input, shape index: {}]
  %s2 = inlined_call_operand.vmem [shape: f32[4,32,8], index: 2, kind: input, shape index: {}]
  %s3 = inlined_call_operand.hbm [shape: f32[2,4,8,8], index: 3, kind: output, shape index: {}]
  %s4 = sld [smem:[#allocation0]]
  $region121: #{tpu_custom_call.1} parent=0
    _
  %s6 = ssub.s32 1, %s4
  %s7 = scalar_select 0, %s6, %s4
  $region1: #{tpu_custom_call.1} parent=0
    #allocation2 [shape = 'u8[16384]{0}', space=vmem, size = 0x4000, scoped, tag = 'input window, operand 0']
    #allocation3 [shape = 'u8[16384]{0}', space=vmem, size = 0x4000, scoped, tag = 'input window, operand 1']
    #allocation4 [shape = 'u8[16384]{0}', space=vmem, size = 0x4000, scoped, tag = 'output window, operand 0']
    #allocation5 [shape = 's32[2]{0}', space=sflag, size = 0x8, scoped, tag = 'scoped memory for tpu_custom_call.1']
    %8 = vsyncpa [#allocation5], 0
    %s9 = scalar_lea.sflag [#allocation5], 1
    %10 = vsyncpa %s9, 0
    loop: start=0, step=1, limit=6
    $region2: #{tpu_custom_call.1} parent=1 // loop_pre_header
      _
    $region3: #{tpu_custom_call.1} parent=1 // loop_header
      %s12 = sphi 0, %s16
      %p13 = scmp.ge.s32.totalorder %s12, 6
      %s19 = sphi 0, %s31
      %s20 = sphi 0, %s27
      %s21 = sphi 0, %s19
      %s22 = sphi 0, %s20
      %s23 = sphi 0, %s21
      %s24 = sphi 0, %s22
      %s36 = sphi 0, %s38
      %s39 = sphi 0, %s36
      %s40 = sphi 0, %s39
      %s56 = sphi 0, %s40
      %s64 = sphi 0, %s66
      %s67 = sphi 0, %s64
      %s68 = sphi 0, %s67
      %s84 = sphi 0, %s68
      %s90 = sphi 0, %s92
      %s93 = sphi 0, %s90
      %s94 = sphi 0, %s93
      %s110 = sphi 0, %s94
      %s118 = sphi 0, %s120
      %s121 = sphi 0, %s118
      %s122 = sphi 0, %s121
      %s138 = sphi 0, %s122
    $region4: #{tpu_custom_call.1} parent=1 // loop_header_branch
      %15 = sbr.rel (%p13) target = $region8
    $region5: #{tpu_custom_call.1} parent=1 // loop_body
      %s17 = ssub.s32 %s12, 1
      %s18 = ssub.s32 %s12, 2
      %s25 = sadd.s32 1, %s20
      %p26 = scmp.ge.s32.totalorder %s25, 1
      %s27 = scalar_select %p26, 0, %s25
      %s28 = sadd.s32 1, %s19
      %s29 = scalar_select %p26, %s28, %s19
      %p30 = scmp.ge.s32.totalorder %s29, 4
      %s31 = scalar_select %p30, 0, %s29
      %s32 = ssub.s32 %s20, %s27
      %s33 = ssub.s32 %s19, %s31
      %s34 = sor.u32 %s32, %s33
      %p35 = scmp.eq.s32.totalorder %s34, 0
      %s37 = sadd.s32 %s36, 1
      %s38 = scalar_select %p35, %s36, %s37
      %p41 = pneg %p35
      %p42 = scmp.eq.s32.totalorder %s12, 3
      %p43 = por %p41, %p42
      %p44 = scmp.ne.s32.totalorder %s36, %s39
      %p45 = scmp.eq.s32.totalorder %s12, 0
      %p46 = por %p44, %p45
      %p47 = scmp.ne.s32.totalorder %s36, %s39
      %p48 = scmp.eq.s32.totalorder %s17, 3
      %p49 = por %p47, %p48
      %p50 = scmp.ne.s32.totalorder %s39, %s40
      %p51 = scmp.eq.s32.totalorder %s17, 0
      %p52 = por %p50, %p51
      %p53 = scmp.ne.s32.totalorder %s39, %s40
      %p54 = scmp.eq.s32.totalorder %s18, 3
      %p55 = por %p53, %p54
      %p57 = scmp.ne.s32.totalorder %s40, %s56
      %p58 = scmp.eq.s32.totalorder %s18, 0
      %p59 = por %p57, %p58
      %s60 = ssub.s32 %s20, %s27
      %s61 = ssub.s32 %s19, %s31
      %s62 = sor.u32 %s60, %s61
      %p63 = scmp.eq.s32.totalorder %s62, 0
      %s65 = sadd.s32 %s64, 1
      %s66 = scalar_select %p63, %s64, %s65
      %p69 = pneg %p63
      %p70 = scmp.eq.s32.totalorder %s12, 3
      %p71 = por %p69, %p70
      %p72 = scmp.ne.s32.totalorder %s64, %s67
      %p73 = scmp.eq.s32.totalorder %s12, 0
      %p74 = por %p72, %p73
      %p75 = scmp.ne.s32.totalorder %s64, %s67
      %p76 = scmp.eq.s32.totalorder %s17, 3
      %p77 = por %p75, %p76
      %p78 = scmp.ne.s32.totalorder %s67, %s68
      %p79 = scmp.eq.s32.totalorder %s17, 0
      %p80 = por %p78, %p79
      %p81 = scmp.ne.s32.totalorder %s67, %s68
      %p82 = scmp.eq.s32.totalorder %s18, 3
      %p83 = por %p81, %p82
      %p85 = scmp.ne.s32.totalorder %s68, %s84
      %p86 = scmp.eq.s32.totalorder %s18, 0
      %p87 = por %p85, %p86
      %s88 = ssub.s32 %s19, %s31
      %p89 = scmp.eq.s32.totalorder %s88, 0
      %s91 = sadd.s32 %s90, 1
      %s92 = scalar_select %p89, %s90, %s91
      %p95 = pneg %p89
      %p96 = scmp.eq.s32.totalorder %s12, 3
      %p97 = por %p95, %p96
      %p98 = scmp.ne.s32.totalorder %s90, %s93
      %p99 = scmp.eq.s32.totalorder %s12, 0
      %p100 = por %p98, %p99
      %p101 = scmp.ne.s32.totalorder %s90, %s93
      %p102 = scmp.eq.s32.totalorder %s17, 3
      %p103 = por %p101, %p102
      %p104 = scmp.ne.s32.totalorder %s93, %s94
      %p105 = scmp.eq.s32.totalorder %s17, 0
      %p106 = por %p104, %p105
      %p107 = scmp.ne.s32.totalorder %s93, %s94
      %p108 = scmp.eq.s32.totalorder %s18, 3
      %p109 = por %p107, %p108
      %p111 = scmp.ne.s32.totalorder %s94, %s110
      %p112 = scmp.eq.s32.totalorder %s18, 0
      %p113 = por %p111, %p112
      %s114 = ssub.s32 %s20, %s27
      %s115 = ssub.s32 %s19, %s31
      %s116 = sor.u32 %s114, %s115
      %p117 = scmp.eq.s32.totalorder %s116, 0
      %s119 = sadd.s32 %s118, 1
      %s120 = scalar_select %p117, %s118, %s119
      %p123 = pneg %p117
      %p124 = scmp.eq.s32.totalorder %s12, 3
      %p125 = por %p123, %p124
      %p126 = scmp.ne.s32.totalorder %s118, %s121
      %p127 = scmp.eq.s32.totalorder %s12, 0
      %p128 = por %p126, %p127
      %p129 = scmp.ne.s32.totalorder %s118, %s121
      %p130 = scmp.eq.s32.totalorder %s17, 3
      %p131 = por %p129, %p130
      %p132 = scmp.ne.s32.totalorder %s121, %s122
      %p133 = scmp.eq.s32.totalorder %s17, 0
      %p134 = por %p132, %p133
      %p135 = scmp.ne.s32.totalorder %s121, %s122
      %p136 = scmp.eq.s32.totalorder %s18, 3
      %p137 = por %p135, %p136
      %p139 = scmp.ne.s32.totalorder %s122, %s138
      %p140 = scmp.eq.s32.totalorder %s18, 0
      %p141 = por %p139, %p140
      %p142 = scmp.le.s32.totalorder 1, %s12
      %p143 = scmp.lt.s32.totalorder %s12, 5
      %p144 = pnand %p142, %p143
      %p145 = pneg %p144
      // Predicated region
      $region9: #{tpu_custom_call.1} parent=5 // pred_check
        _
      $region10: #{tpu_custom_call.1} parent=5 // pred_check_branch
        %147 = sbr.rel (%p144) target = $region12
      $region11: #{tpu_custom_call.1} parent=5 // pred_region
        %s148 = ssub.s32 %s12, 1
      $region12: #{tpu_custom_call.1} parent=5 // pred_fallthru
        _
      %p149 = scmp.lt.s32.totalorder %s12, 4
      // Predicated region
      $region13: #{tpu_custom_call.1} parent=5 // pred_check
        %p150 = pneg %p149
      $region14: #{tpu_custom_call.1} parent=5 // pred_check_branch
        %152 = sbr.rel (%p150) target = $region16
      $region15: #{tpu_custom_call.1} parent=5 // pred_region
        // Predicated region
        $region17: #{tpu_custom_call.1} parent=15 // pred_check
          %p153 = pneg %p46
        $region18: #{tpu_custom_call.1} parent=15 // pred_check_branch
          %155 = sbr.rel (%p153) target = $region20
        $region19: #{tpu_custom_call.1} parent=15 // pred_region
          %s156 = sand.u32 %s36, 1
          %s157 = sand.u32 %s36, 1
          %s158 = smul.addr %s157, 16
          %s159 = scalar_lea.vmem [#allocation2], %s158
          %s160 = smul.u32 2, %s20
          %s161 = smul.addr %s160, 4
          %s162 = sadd.s32 %s19, %s161
          %s163 = smul.addr %s162, 8
          %s164 = scalar_lea.vmem %s0, %s163
          // Predicated region
          $region21: #{tpu_custom_call.1} parent=19 // pred_check
            _
          $region22: #{tpu_custom_call.1} parent=19 // pred_check_branch
            %166 = sbr.rel (0) target = $region24
          $region23: #{tpu_custom_call.1} parent=19 // pred_region
            // Predicated region
            $region25: #{tpu_custom_call.1} parent=23 // pred_check
              _
            $region26: #{tpu_custom_call.1} parent=23 // pred_check_branch
              %168 = sbr.rel (0) target = $region28
            $region27: #{tpu_custom_call.1} parent=23 // pred_region
              // Predicated region
              $region40: #{tpu_custom_call.1} parent=27 // pred_check
                _
              $region41: #{tpu_custom_call.1} parent=27 // pred_check_branch
                %185 = sbr.rel (0) target = $region43
              $region42: #{tpu_custom_call.1} parent=27 // pred_region
                loop: start=0, step=1, limit=1
                $region44: #{tpu_custom_call.1} parent=42 // loop_pre_header
                  _
                $region45: #{tpu_custom_call.1} parent=42 // loop_header
                  %s187 = sphi 0, %s191
                  %p188 = scmp.ge.s32.totalorder %s187, 1
                  %s192 = sphi %s164, %s164
                  %s193 = sphi %s159, %s159
                $region46: #{tpu_custom_call.1} parent=42 // loop_header_branch
                  %190 = sbr.rel (%p188) target = $region50
                $region47: #{tpu_custom_call.1} parent=42 // loop_body
                  %v194 = vld [vmem:[%s192] sm:$0xff]
                  %195 = vst [vmem:[%s193] sm:$0xff] %v194
                  %v196 = vld [vmem:[%s192 + $0x20] sm:$0xff]
                  %197 = vst [vmem:[%s193 + $0x8] sm:$0xff] %v196
                $region48: #{tpu_custom_call.1} parent=42 // loop_footer
                  %s191 = sadd.s32 1, %s187
                $region49: #{tpu_custom_call.1} parent=42 // loop_footer_branch
                  %186 = sbr.rel target = $region45
                $region50: #{tpu_custom_call.1} parent=42 // loop_exit
                  _
              $region43: #{tpu_custom_call.1} parent=27 // pred_fallthru
                _
              // Predicated region
              $region51: #{tpu_custom_call.1} parent=27 // pred_check
                _
              $region52: #{tpu_custom_call.1} parent=27 // pred_check_branch
                %199 = sbr.rel target = $region54
              $region53: #{tpu_custom_call.1} parent=27 // pred_region
                _
              $region54: #{tpu_custom_call.1} parent=27 // pred_fallthru
                _
            $region28: #{tpu_custom_call.1} parent=23 // pred_fallthru
              _
            // Predicated region
            $region29: #{tpu_custom_call.1} parent=23 // pred_check
              _
            $region30: #{tpu_custom_call.1} parent=23 // pred_check_branch
              %170 = sbr.rel target = $region32
            $region31: #{tpu_custom_call.1} parent=23 // pred_region
              loop: start=0, step=1, limit=1
              $region33: #{tpu_custom_call.1} parent=31 // loop_pre_header
                _
              $region34: #{tpu_custom_call.1} parent=31 // loop_header
                %s173 = sphi 0, %s177
                %p174 = scmp.ge.s32.totalorder %s173, 1
                %s178 = sphi %s164, %s164
                %s179 = sphi %s159, %s159
              $region35: #{tpu_custom_call.1} parent=31 // loop_header_branch
                %176 = sbr.rel (%p174) target = $region39
              $region36: #{tpu_custom_call.1} parent=31 // loop_body
                %v180 = vld [vmem:[%s178] sm:$0xff]
                %181 = vst [vmem:[%s179] sm:$0xff] %v180
                %v182 = vld [vmem:[%s178 + $0x20] sm:$0xff]
                %183 = vst [vmem:[%s179 + $0x8] sm:$0xff] %v182
              $region37: #{tpu_custom_call.1} parent=31 // loop_footer
                %s177 = sadd.s32 1, %s173
              $region38: #{tpu_custom_call.1} parent=31 // loop_footer_branch
                %172 = sbr.rel target = $region34
              $region39: #{tpu_custom_call.1} parent=31 // loop_exit
                _
            $region32: #{tpu_custom_call.1} parent=23 // pred_fallthru
              _
          $region24: #{tpu_custom_call.1} parent=19 // pred_fallthru
            _
          %200 = vnop
        $region20: #{tpu_custom_call.1} parent=15 // pred_fallthru
          _
        // Predicated region
        $region55: #{tpu_custom_call.1} parent=15 // pred_check
          %p201 = pneg %p74
        $region56: #{tpu_custom_call.1} parent=15 // pred_check_branch
          %203 = sbr.rel (%p201) target = $region58
        $region57: #{tpu_custom_call.1} parent=15 // pred_region
          %s204 = sand.u32 %s64, 1
          %s205 = sand.u32 %s64, 1
          %s206 = smul.addr %s205, 16
          %s207 = scalar_lea.vmem [#allocation3], %s206
          %s208 = smul.u32 2, %s20
          %s209 = smul.addr %s208, 4
          %s210 = sadd.s32 %s19, %s209
          %s211 = smul.addr %s210, 8
          %s212 = scalar_lea.vmem %s1, %s211
          // Predicated region
          $region59: #{tpu_custom_call.1} parent=57 // pred_check
            _
          $region60: #{tpu_custom_call.1} parent=57 // pred_check_branch
            %214 = sbr.rel (0) target = $region62
          $region61: #{tpu_custom_call.1} parent=57 // pred_region
            // Predicated region
            $region63: #{tpu_custom_call.1} parent=61 // pred_check
              _
            $region64: #{tpu_custom_call.1} parent=61 // pred_check_branch
              %216 = sbr.rel (0) target = $region66
            $region65: #{tpu_custom_call.1} parent=61 // pred_region
              // Predicated region
              $region78: #{tpu_custom_call.1} parent=65 // pred_check
                _
              $region79: #{tpu_custom_call.1} parent=65 // pred_check_branch
                %233 = sbr.rel (0) target = $region81
              $region80: #{tpu_custom_call.1} parent=65 // pred_region
                loop: start=0, step=1, limit=1
                $region82: #{tpu_custom_call.1} parent=80 // loop_pre_header
                  _
                $region83: #{tpu_custom_call.1} parent=80 // loop_header
                  %s235 = sphi 0, %s239
                  %p236 = scmp.ge.s32.totalorder %s235, 1
                  %s240 = sphi %s212, %s212
                  %s241 = sphi %s207, %s207
                $region84: #{tpu_custom_call.1} parent=80 // loop_header_branch
                  %238 = sbr.rel (%p236) target = $region88
                $region85: #{tpu_custom_call.1} parent=80 // loop_body
                  %v242 = vld [vmem:[%s240] sm:$0xff]
                  %243 = vst [vmem:[%s241] sm:$0xff] %v242
                  %v244 = vld [vmem:[%s240 + $0x20] sm:$0xff]
                  %245 = vst [vmem:[%s241 + $0x8] sm:$0xff] %v244
                $region86: #{tpu_custom_call.1} parent=80 // loop_footer
                  %s239 = sadd.s32 1, %s235
                $region87: #{tpu_custom_call.1} parent=80 // loop_footer_branch
                  %234 = sbr.rel target = $region83
                $region88: #{tpu_custom_call.1} parent=80 // loop_exit
                  _
              $region81: #{tpu_custom_call.1} parent=65 // pred_fallthru
                _
              // Predicated region
              $region89: #{tpu_custom_call.1} parent=65 // pred_check
                _
              $region90: #{tpu_custom_call.1} parent=65 // pred_check_branch
                %247 = sbr.rel target = $region92
              $region91: #{tpu_custom_call.1} parent=65 // pred_region
                _
              $region92: #{tpu_custom_call.1} parent=65 // pred_fallthru
                _
            $region66: #{tpu_custom_call.1} parent=61 // pred_fallthru
              _
            // Predicated region
            $region67: #{tpu_custom_call.1} parent=61 // pred_check
              _
            $region68: #{tpu_custom_call.1} parent=61 // pred_check_branch
              %218 = sbr.rel target = $region70
            $region69: #{tpu_custom_call.1} parent=61 // pred_region
              loop: start=0, step=1, limit=1
              $region71: #{tpu_custom_call.1} parent=69 // loop_pre_header
                _
              $region72: #{tpu_custom_call.1} parent=69 // loop_header
                %s221 = sphi 0, %s225
                %p222 = scmp.ge.s32.totalorder %s221, 1
                %s226 = sphi %s212, %s212
                %s227 = sphi %s207, %s207
              $region73: #{tpu_custom_call.1} parent=69 // loop_header_branch
                %224 = sbr.rel (%p222) target = $region77
              $region74: #{tpu_custom_call.1} parent=69 // loop_body
                %v228 = vld [vmem:[%s226] sm:$0xff]
                %229 = vst [vmem:[%s227] sm:$0xff] %v228
                %v230 = vld [vmem:[%s226 + $0x20] sm:$0xff]
                %231 = vst [vmem:[%s227 + $0x8] sm:$0xff] %v230
              $region75: #{tpu_custom_call.1} parent=69 // loop_footer
                %s225 = sadd.s32 1, %s221
              $region76: #{tpu_custom_call.1} parent=69 // loop_footer_branch
                %220 = sbr.rel target = $region72
              $region77: #{tpu_custom_call.1} parent=69 // loop_exit
                _
            $region70: #{tpu_custom_call.1} parent=61 // pred_fallthru
              _
          $region62: #{tpu_custom_call.1} parent=57 // pred_fallthru
            _
          %248 = vnop
        $region58: #{tpu_custom_call.1} parent=15 // pred_fallthru
          _
        // Predicated region
        $region93: #{tpu_custom_call.1} parent=15 // pred_check
          %p249 = pneg %p100
        $region94: #{tpu_custom_call.1} parent=15 // pred_check_branch
          %251 = sbr.rel (%p249) target = $region96
        $region95: #{tpu_custom_call.1} parent=15 // pred_region
          %p252 = scmp.lt.s32.totalorder %s19, 3
          %s253 = scalar_select %p252, %s19, 3
          %s254 = smul.addr %s253, 4
          %s255 = smul.addr %s254, 8
          %s256 = scalar_lea.vmem %s2, %s255
        $region96: #{tpu_custom_call.1} parent=15 // pred_fallthru
          _
      $region16: #{tpu_custom_call.1} parent=5 // pred_fallthru
        _
      %p257 = scmp.le.s32.totalorder 1, %s12
      %p258 = scmp.lt.s32.totalorder %s12, 5
      %p259 = pnand %p257, %p258
      %p260 = pneg %p259
      // Predicated region
      $region97: #{tpu_custom_call.1} parent=5 // pred_check
        _
      $region98: #{tpu_custom_call.1} parent=5 // pred_check_branch
        %262 = sbr.rel (%p259) target = $region100
      $region99: #{tpu_custom_call.1} parent=5 // pred_region
        %s263 = ssub.s32 %s12, 1
        %s264 = sand.u32 %s39, 1
        %s265 = sand.u32 %s39, 1
        %s266 = smul.addr %s265, 16
        %s267 = scalar_lea.vmem [#allocation2], %s266
        // Predicated region
        $region101: #{tpu_custom_call.1} parent=99 // pred_check
          %p268 = pneg %p52
        $region102: #{tpu_custom_call.1} parent=99 // pred_check_branch
          %270 = sbr.rel (%p268) target = $region104
        $region103: #{tpu_custom_call.1} parent=99 // pred_region
          _
        $region104: #{tpu_custom_call.1} parent=99 // pred_fallthru
          _
        %s271 = sand.u32 %s67, 1
        %s272 = sand.u32 %s67, 1
        %s273 = smul.addr %s272, 16
        %s274 = scalar_lea.vmem [#allocation3], %s273
        // Predicated region
        $region105: #{tpu_custom_call.1} parent=99 // pred_check
          %p275 = pneg %p80
        $region106: #{tpu_custom_call.1} parent=99 // pred_check_branch
          %277 = sbr.rel (%p275) target = $region108
        $region107: #{tpu_custom_call.1} parent=99 // pred_region
          _
        $region108: #{tpu_custom_call.1} parent=99 // pred_fallthru
          _
        %s278 = sand.u32 %s39, 1
        %s279 = sand.u32 %s39, 1
        %s280 = smul.addr %s279, 16
        %s281 = scalar_lea.vmem [#allocation2], %s280
        %p282 = pneg %p52
        %p283 = pneg %p49
        %s284 = sand.u32 %s67, 1
        %s285 = sand.u32 %s67, 1
        %s286 = smul.addr %s285, 16
        %s287 = scalar_lea.vmem [#allocation3], %s286
        %p288 = pneg %p80
        %p289 = pneg %p77
        %p290 = scmp.lt.s32.totalorder %s21, 3
        %s291 = scalar_select %p290, %s21, 3
        %s292 = smul.addr %s291, 4
        %s293 = smul.addr %s292, 8
        %s294 = scalar_lea.vmem %s2, %s293
        %p295 = pneg %p106
        %p296 = pneg %p103
        %p297 = pneg %p134
        %p298 = pneg %p131
        %s299 = sand.u32 %s121, 1
        %s300 = scalar_lea.sflag [#allocation5], %s299
        %s301 = sand.u32 %s121, 1
        %s302 = smul.addr %s301, 16
        %s303 = scalar_lea.vmem [#allocation4], %s302
        %s304 = smul.u32 2, %s22
        %s305 = smul.u32 2, %s22
        %p306 = scmp.lt.s32.totalorder %s21, 3
        %s307 = scalar_select %p306, %s21, 3
        %s308 = smul.addr %s307, 4
        %s309 = smul.addr %s308, 8
        %s310 = scalar_lea.vmem %s2, %s309
        %s311 = smul.u32 2, %s22
        %v312 = vld [vmem:[%s267] sm:$0xff]
        %v313 = vld [vmem:[%s267 + $0x8] sm:$0xff]
        %316 = vrot.lane.b32.xlu0 %v312, 112
        %v317 = vpop.permute.xlu0 %316
        %318 = vrot.lane.b32.xlu0 %v313, 112
        %v319 = vpop.permute.xlu0 %318
        %v322 = vadd.f32 %v312, %v317
        %v323 = vadd.f32 %v313, %v319
        %324 = vrot.lane.b32.xlu0 %v312, 96
        %v325 = vpop.permute.xlu0 %324
        %326 = vrot.lane.b32.xlu0 %v313, 96
        %v327 = vpop.permute.xlu0 %326
        %v330 = vadd.f32 %v322, %v325
        %v331 = vadd.f32 %v323, %v327
        %332 = vrot.lane.b32.xlu0 %v312, 80
        %v333 = vpop.permute.xlu0 %332
        %334 = vrot.lane.b32.xlu0 %v313, 80
        %v335 = vpop.permute.xlu0 %334
        %v338 = vadd.f32 %v330, %v333
        %v339 = vadd.f32 %v331, %v335
        %340 = vrot.lane.b32.xlu0 %v312, 64
        %v341 = vpop.permute.xlu0 %340
        %342 = vrot.lane.b32.xlu0 %v313, 64
        %v343 = vpop.permute.xlu0 %342
        %v346 = vadd.f32 %v338, %v341
        %v347 = vadd.f32 %v339, %v343
        %348 = vrot.lane.b32.xlu0 %v312, 48
        %v349 = vpop.permute.xlu0 %348
        %350 = vrot.lane.b32.xlu0 %v313, 48
        %v351 = vpop.permute.xlu0 %350
        %v354 = vadd.f32 %v346, %v349
        %v355 = vadd.f32 %v347, %v351
        %356 = vrot.lane.b32.xlu0 %v312, 32
        %v357 = vpop.permute.xlu0 %356
        %358 = vrot.lane.b32.xlu0 %v313, 32
        %v359 = vpop.permute.xlu0 %358
        %v362 = vadd.f32 %v354, %v357
        %v363 = vadd.f32 %v355, %v359
        %364 = vrot.lane.b32.xlu0 %v312, 16
        %v365 = vpop.permute.xlu0 %364
        %366 = vrot.lane.b32.xlu0 %v313, 16
        %v367 = vpop.permute.xlu0 %366
        %v370 = vadd.f32 %v362, %v365
        %v371 = vadd.f32 %v363, %v367
        %v372 = vld [vmem:[%s274] sm:$0xff]
        %v373 = vld [vmem:[%s274 + $0x8] sm:$0xff]
        %376 = vrot.lane.b32.xlu0 %v372, 112
        %v377 = vpop.permute.xlu0 %376
        %378 = vrot.lane.b32.xlu0 %v373, 112
        %v379 = vpop.permute.xlu0 %378
        %v382 = vadd.f32 %v372, %v377
        %v383 = vadd.f32 %v373, %v379
        %384 = vrot.lane.b32.xlu0 %v372, 96
        %v385 = vpop.permute.xlu0 %384
        %386 = vrot.lane.b32.xlu0 %v373, 96
        %v387 = vpop.permute.xlu0 %386
        %v390 = vadd.f32 %v382, %v385
        %v391 = vadd.f32 %v383, %v387
        %392 = vrot.lane.b32.xlu0 %v372, 80
        %v393 = vpop.permute.xlu0 %392
        %394 = vrot.lane.b32.xlu0 %v373, 80
        %v395 = vpop.permute.xlu0 %394
        %v398 = vadd.f32 %v390, %v393
        %v399 = vadd.f32 %v391, %v395
        %400 = vrot.lane.b32.xlu0 %v372, 64
        %v401 = vpop.permute.xlu0 %400
        %402 = vrot.lane.b32.xlu0 %v373, 64
        %v403 = vpop.permute.xlu0 %402
        %v406 = vadd.f32 %v398, %v401
        %v407 = vadd.f32 %v399, %v403
        %408 = vrot.lane.b32.xlu0 %v372, 48
        %v409 = vpop.permute.xlu0 %408
        %410 = vrot.lane.b32.xlu0 %v373, 48
        %v411 = vpop.permute.xlu0 %410
        %v414 = vadd.f32 %v406, %v409
        %v415 = vadd.f32 %v407, %v411
        %416 = vrot.lane.b32.xlu0 %v372, 32
        %v417 = vpop.permute.xlu0 %416
        %418 = vrot.lane.b32.xlu0 %v373, 32
        %v419 = vpop.permute.xlu0 %418
        %v422 = vadd.f32 %v414, %v417
        %v423 = vadd.f32 %v415, %v419
        %424 = vrot.lane.b32.xlu0 %v372, 16
        %v425 = vpop.permute.xlu0 %424
        %426 = vrot.lane.b32.xlu0 %v373, 16
        %v427 = vpop.permute.xlu0 %426
        %v430 = vadd.f32 %v422, %v425
        %v431 = vadd.f32 %v423, %v427
        %v432 = vld [vmem:[%s310] sm:$0xff]
        %v433 = vld [vmem:[%s310 + $0x8] sm:$0xff]
        %v434 = vld [vmem:[%s310 + $0x10] sm:$0xff]
        %v435 = vld [vmem:[%s310 + $0x18] sm:$0xff]
        %vm436 = vcmask 130048
        %v438 = vsel %vm436, %v430, 0
        %v441 = vsel %vm436, %v431, 0
        %443 = vmatprep.subr.mxu0 0.0
        %444 = vmatpush1.msra.mxu0 %v434
        %445 = vmatprep.subr.mxu0 0.0
        %446 = vmatpush1.msra.mxu0 %v435
        %447 = vmatprep.subr.mxu0 0.0
        %448 = vmatpush1.msra.mxu0 0.0
        %449 = vmatprep.subr.mxu0 0.0
        %450 = vmatpush1.msra.mxu0 0.0
        %451 = vmatprep.subr.mxu0 0.0
        %452 = vmatpush1.msra.mxu0 0.0
        %453 = vmatprep.subr.mxu0 0.0
        %454 = vmatpush1.msra.mxu0 0.0
        %455 = vmatprep.subr.mxu0 0.0
        %456 = vmatpush1.msra.mxu0 0.0
        %457 = vmatprep.subr.mxu0 0.0
        %458 = vmatpush1.msra.mxu0 0.0
        %459 = vmatprep.subr.mxu0 0.0
        %460 = vmatpush1.msra.mxu0 0.0
        %461 = vmatprep.subr.mxu0 0.0
        %462 = vmatpush1.msra.mxu0 0.0
        %463 = vmatprep.subr.mxu0 0.0
        %464 = vmatpush1.msra.mxu0 0.0
        %465 = vmatprep.subr.mxu0 0.0
        %466 = vmatpush1.msra.mxu0 0.0
        %467 = vmatprep.subr.mxu0 0.0
        %468 = vmatpush1.msra.mxu0 0.0
        %469 = vmatprep.subr.mxu0 0.0
        %470 = vmatpush1.msra.mxu0 0.0
        %471 = vmatprep.subr.mxu0 0.0
        %472 = vmatpush1.msra.mxu0 0.0
        %473 = vmatprep.subr.mxu0 0.0
        %474 = vmatpush1.msra.mxu0 0.0
        %475 = vmatprep.subr.mxu0 0.0
        %476 = vmatpush1.msra.mxu0 0.0
        %477 = vmatprep.subr.mxu0 0.0
        %478 = vmatpush1.msra.mxu0 0.0
        %479 = vmatprep.subr.mxu0 0.0
        %480 = vmatpush1.msra.mxu0 0.0
        %481 = vmatprep.subr.mxu0 0.0
        %482 = vmatpush1.msra.mxu0 0.0
        %483 = vmatprep.subr.mxu0 0.0
        %484 = vmatpush1.msra.mxu0 0.0
        %485 = vmatprep.subr.mxu0 0.0
        %486 = vmatpush1.msra.mxu0 0.0
        %487 = vmatprep.subr.mxu0 0.0
        %488 = vmatpush1.msra.mxu0 0.0
        %489 = vmatprep.subr.mxu0 0.0
        %490 = vmatpush1.msra.mxu0 0.0
        %491 = vmatprep.subr.mxu0 0.0
        %492 = vmatpush1.msra.mxu0 0.0
        %493 = vmatprep.subr.mxu0 0.0
        %494 = vmatpush1.msra.mxu0 0.0
        %495 = vmatprep.subr.mxu0 0.0
        %496 = vmatpush1.msra.mxu0 0.0
        %497 = vmatprep.subr.mxu0 0.0
        %498 = vmatpush1.msra.mxu0 0.0
        %499 = vmatprep.subr.mxu0 0.0
        %500 = vmatpush1.msra.mxu0 0.0
        %501 = vmatprep.subr.mxu0 0.0
        %502 = vmatpush1.msra.mxu0 0.0
        %503 = vmatprep.subr.mxu0 0.0
        %504 = vmatpush1.msra.mxu0 0.0
        %505 = vmatprep.subr.mxu0 0.0
        %506 = vmatpush1.msra.mxu0 0.0
        %507 = vmatprep.mubr.f32.mxu0 0.0
        %508 = vmatmul.mubr.f32.gmra.mrb[0].mxu0 %v438
        %v509 = vpop.f32.mrb[0].mxu0
        %v510 = vadd.f32 0.0, %v509
        %v511 = vpop.f32.mrb[0].mxu0
        %512 = vmatprep.mubr.f32.mxu0 0.0
        %513 = vmatmul.mubr.f32.gmra.mrb[0].mxu0 %v441
        %v514 = vpop.f32.mrb[0].mxu0
        %v515 = vadd.f32 0.0, %v514
        %v516 = vpop.f32.mrb[0].mxu0
        %517 = vdwg.mxu0
        %v519 = vsel %vm436, %v370, 0
        %v522 = vsel %vm436, %v371, 0
        %524 = vmatprep.subr.mxu0 0.0
        %525 = vmatpush1.msra.mxu0 %v432
        %526 = vmatprep.subr.mxu0 0.0
        %527 = vmatpush1.msra.mxu0 %v433
        %528 = vmatprep.subr.mxu0 0.0
        %529 = vmatpush1.msra.mxu0 0.0
        %530 = vmatprep.subr.mxu0 0.0
        %531 = vmatpush1.msra.mxu0 0.0
        %532 = vmatprep.subr.mxu0 0.0
        %533 = vmatpush1.msra.mxu0 0.0
        %534 = vmatprep.subr.mxu0 0.0
        %535 = vmatpush1.msra.mxu0 0.0
        %536 = vmatprep.subr.mxu0 0.0
        %537 = vmatpush1.msra.mxu0 0.0
        %538 = vmatprep.subr.mxu0 0.0
        %539 = vmatpush1.msra.mxu0 0.0
        %540 = vmatprep.subr.mxu0 0.0
        %541 = vmatpush1.msra.mxu0 0.0
        %542 = vmatprep.subr.mxu0 0.0
        %543 = vmatpush1.msra.mxu0 0.0
        %544 = vmatprep.subr.mxu0 0.0
        %545 = vmatpush1.msra.mxu0 0.0
        %546 = vmatprep.subr.mxu0 0.0
        %547 = vmatpush1.msra.mxu0 0.0
        %548 = vmatprep.subr.mxu0 0.0
        %549 = vmatpush1.msra.mxu0 0.0
        %550 = vmatprep.subr.mxu0 0.0
        %551 = vmatpush1.msra.mxu0 0.0
        %552 = vmatprep.subr.mxu0 0.0
        %553 = vmatpush1.msra.mxu0 0.0
        %554 = vmatprep.subr.mxu0 0.0
        %555 = vmatpush1.msra.mxu0 0.0
        %556 = vmatprep.subr.mxu0 0.0
        %557 = vmatpush1.msra.mxu0 0.0
        %558 = vmatprep.subr.mxu0 0.0
        %559 = vmatpush1.msra.mxu0 0.0
        %560 = vmatprep.subr.mxu0 0.0
        %561 = vmatpush1.msra.mxu0 0.0
        %562 = vmatprep.subr.mxu0 0.0
        %563 = vmatpush1.msra.mxu0 0.0
        %564 = vmatprep.subr.mxu0 0.0
        %565 = vmatpush1.msra.mxu0 0.0
        %566 = vmatprep.subr.mxu0 0.0
        %567 = vmatpush1.msra.mxu0 0.0
        %568 = vmatprep.subr.mxu0 0.0
        %569 = vmatpush1.msra.mxu0 0.0
        %570 = vmatprep.subr.mxu0 0.0
        %571 = vmatpush1.msra.mxu0 0.0
        %572 = vmatprep.subr.mxu0 0.0
        %573 = vmatpush1.msra.mxu0 0.0
        %574 = vmatprep.subr.mxu0 0.0
        %575 = vmatpush1.msra.mxu0 0.0
        %576 = vmatprep.subr.mxu0 0.0
        %577 = vmatpush1.msra.mxu0 0.0
        %578 = vmatprep.subr.mxu0 0.0
        %579 = vmatpush1.msra.mxu0 0.0
        %580 = vmatprep.subr.mxu0 0.0
        %581 = vmatpush1.msra.mxu0 0.0
        %582 = vmatprep.subr.mxu0 0.0
        %583 = vmatpush1.msra.mxu0 0.0
        %584 = vmatprep.subr.mxu0 0.0
        %585 = vmatpush1.msra.mxu0 0.0
        %586 = vmatprep.subr.mxu0 0.0
        %587 = vmatpush1.msra.mxu0 0.0
        %588 = vmatprep.mubr.f32.mxu0 0.0
        %589 = vmatmul.mubr.f32.gmra.mrb[0].mxu0 %v519
        %v590 = vpop.f32.mrb[0].mxu0
        %v591 = vadd.f32 %v510, %v590
        %v592 = vpop.f32.mrb[0].mxu0
        %593 = vmatprep.mubr.f32.mxu0 0.0
        %594 = vmatmul.mubr.f32.gmra.mrb[0].mxu0 %v522
        %v595 = vpop.f32.mrb[0].mxu0
        %v596 = vadd.f32 %v515, %v595
        %v597 = vpop.f32.mrb[0].mxu0
        %598 = vdwg.mxu0
        %v599 = vmax.f32 %v591, 0.0
        %v600 = vmax.f32 %v596, 0.0
        %vm601 = vcmask 64512
        %v602 = vsel %vm601, %v599, -inf
        %603 = vmax.xlane.f32.xlu0 %v602
        %v604 = vpop.xlane.xlu0 %603
        %v605 = vsel %vm601, %v600, -inf
        %606 = vmax.xlane.f32.xlu0 %v605
        %v607 = vpop.xlane.xlu0 %606
        %v608 = vsub.f32 %v599, %v604
        %v609 = vsub.f32 %v600, %v607
        %v610 = vmul.f32 %v608, 1.442695
        %v611 = vpow.pop %v610
        %v612 = vmul.f32 %v609, 1.442695
        %v613 = vpow.pop %v612
        %v614 = vsel %vm601, %v611, 0.0
        %615 = vadd.xlane.f32.xlu0 %v614
        %v616 = vpop.xlane.xlu0 %615
        %v617 = vsel %vm601, %v613, 0.0
        %618 = vadd.xlane.f32.xlu0 %v617
        %v619 = vpop.xlane.xlu0 %618
        %v620 = vrcp.pop %v616
        %v621 = vmul.f32 %v611, %v620
        %v622 = vrcp.pop %v619
        %v623 = vmul.f32 %v613, %v622
        %624 = vst.msk [vmem:[%s303] sm:$0xff] %vm601, %v621
        %625 = vst.msk [vmem:[%s303 + $0x8] sm:$0xff] %vm601, %v623
        %s626 = sand.u32 %s121, 1
        %s627 = scalar_lea.sflag [#allocation5], %s626
        %s628 = sand.u32 %s121, 1
        %s629 = smul.addr %s628, 16
        %s630 = scalar_lea.vmem [#allocation4], %s629
        // Predicated region
        $region109: #{tpu_custom_call.1} parent=99 // pred_check
          %p631 = pneg %p131
        $region110: #{tpu_custom_call.1} parent=99 // pred_check_branch
          %633 = sbr.rel (%p631) target = $region112
        $region111: #{tpu_custom_call.1} parent=99 // pred_region
          %s634 = smul.u32 2, %s22
          %s636 = ssub.s32 256, 256
          %637 = vsyncadd %s627, %s636
          %s638 = smul.addr %s634, 4
          %s639 = sadd.s32 %s21, %s638
          %s640 = smul.addr %s639, 128
          %s641 = scalar_lea.hbm %s3, %s640
          %s642 = sshll.u32 %s630, 4
          %s643 = int_to_ptr.vmem [resolvable:$true] %s642
          %648 = dma.vmem_to_hbm [thread:$0]  %s643, 256, %s641, %s627, 128, 512, 8
        $region112: #{tpu_custom_call.1} parent=99 // pred_fallthru
          _
      $region100: #{tpu_custom_call.1} parent=5 // pred_fallthru
        _
      %p649 = scmp.le.s32.totalorder 2, %s12
      // Predicated region
      $region113: #{tpu_custom_call.1} parent=5 // pred_check
        %p650 = pneg %p649
      $region114: #{tpu_custom_call.1} parent=5 // pred_check_branch
        %652 = sbr.rel (%p650) target = $region116
      $region115: #{tpu_custom_call.1} parent=5 // pred_region
        %s653 = ssub.s32 %s12, 2
        // Predicated region
        $region117: #{tpu_custom_call.1} parent=115 // pred_check
          %p654 = pneg %p137
        $region118: #{tpu_custom_call.1} parent=115 // pred_check_branch
          %656 = sbr.rel (%p654) target = $region120
        $region119: #{tpu_custom_call.1} parent=115 // pred_region
          %s657 = sand.u32 %s122, 1
          %s658 = scalar_lea.sflag [#allocation5], %s657
          %s659 = sand.u32 %s122, 1
          %s660 = smul.addr %s659, 16
          %s661 = scalar_lea.vmem [#allocation4], %s660
          %662 = dma.done %s658, 256
        $region120: #{tpu_custom_call.1} parent=115 // pred_fallthru
          _
      $region116: #{tpu_custom_call.1} parent=5 // pred_fallthru
        _
    $region6: #{tpu_custom_call.1} parent=1 // loop_footer
      %s16 = sadd.s32 1, %s12
    $region7: #{tpu_custom_call.1} parent=1 // loop_footer_branch
      %11 = sbr.rel target = $region3
    $region8: #{tpu_custom_call.1} parent=1 // loop_exit
      _
    %663 = vsyncpa [#allocation5], 1
    %s664 = scalar_lea.sflag [#allocation5], 1
    %665 = vsyncpa %s664, 1

</llo_original>
